<compile_context>
chip_gen: v7x
topology: tpu7x:2x2x1
jax: 0.10.0
libtpu: 0.0.40
codegen_flags: <defaults>
</compile_context>

<pallas_src>
import functools
import math

import jax
import jax.numpy as jnp
from jax.experimental import pallas as pl
from jax.experimental.pallas import tpu as pltpu


def _boundary_head_kernel(x_ref, w_ref, b_ref, sal_ref, out_ref, *,
                          kernel_size, t_len):
    # Block shapes:
    #   x_ref:   (m_tile, C)  input dtype (bf16 ok -> native MXU operand)
    #   w_ref:   (3, C)       rows = [center, window, offset], same dtype as x
    #   b_ref:   (3, 1)       f32 bias
    #   sal_ref: (1, m_tile)  f32 saliency, flattened (B*T) on the lane axis
    #   out_ref: (3, m_tile)  f32 lane-dense output slab
    x = x_ref[...]                                        # (m_tile, C)
    w = w_ref[...]                                        # (3, C)
    bias = b_ref[...].astype(jnp.float32)                 # (3, 1)
    mask = (sal_ref[...] >= 0.0).astype(jnp.float32)      # (1, m_tile)

    # All three Linear(C, 1) heads as one MXU matmul with f32 accumulation.
    # Result is lane-dense with the flattened batch*time axis on the lanes.
    p = jnp.einsum('kc,mc->km', w, x,
                   preferred_element_type=jnp.float32) + bias    # (3, m_tile)

    # sigmoid * mask on the whole tile (EUP sigmoid costs the same on 3 rows
    # as on 1); only row 0 (center) of this processed tile is kept below.
    center_all = jax.nn.sigmoid(p) * mask                 # (3, m_tile)

    # F.max_pool1d(center, kernel, stride=1, padding=(kernel-1)//2) followed
    # by keep = (hmax == center); center *= keep.  kernel=1 is an identity.
    # Validity uses lane_index % T so rolls never mix adjacent samples of the
    # flattened (B*T) lane axis.
    pad = (kernel_size - 1) // 2
    hmax = center_all
    if pad > 0:
        lane = jax.lax.broadcasted_iota(jnp.int32, center_all.shape, 1)
        t_idx = lane % t_len                               # hoisted out of loop
        for off in range(-pad, pad + 1):
            if off == 0:
                continue
            shifted = pltpu.roll(center_all, shift=-off, axis=1)
            valid = jnp.logical_and(t_idx + off >= 0, t_idx + off < t_len)
            hmax = jnp.maximum(hmax, jnp.where(valid, shifted, -1.0))
    center_all = center_all * (hmax == center_all).astype(jnp.float32)

    # Row 0 <- NMS'd center, rows 1..2 <- raw window/offset logits.
    row = jax.lax.broadcasted_iota(jnp.int32, p.shape, 0)
    out_ref[...] = jnp.where(row == 0, center_all, p)      # single full-tile store


def _pick_m_tile(M, T, C, in_itemsize, kernel_size):
    """Pick the lane-tile along the flattened M = B*T axis.

    Constraints: the tile must be a multiple of 128 (unmasked full-lane
    stores / (8,128) tiling) and, when kernel_size > 1, a multiple of T so
    the max-pool NMS never crosses a sample boundary inside a block.  Small
    problems get a single full block (grid=(1,)); large ones get >= 2 chunks
    (v7x two-TensorCore sharding) sized so the double-buffered working set
    stays ~<= 8 MiB per block (safe on v7x's 64 MiB VMEM, trivially on
    v5e/v6e's 128 MiB).
    """
    align = 128
    if kernel_size > 1:
        align = align * T // math.gcd(align, T)            # lcm(128, T)
    if M % (2 * align) != 0:
        return M                                            # one full block

    def blk_bytes(m):
        # double-buffered x + out + sal (+ tiny w/b)
        return 2 * (m * C * in_itemsize + 3 * m * 4 + m * 4
                    + 3 * C * in_itemsize + 3 * 4)

    m_tile = M // 2
    while (m_tile > align and m_tile % 2 == 0 and (m_tile // 2) % align == 0
           and blk_bytes(m_tile) > (8 << 20)):
        m_tile //= 2
    return m_tile


def boundary_head_preds_level(x, w, b, saliency, *, kernel_size=1):
    """Run the fused head kernel for one prediction level.

    x:        (B, T, C)  activations (bf16 recommended; fed to the MXU as-is).
    w:        (3, C)     stacked [center, window, offset] Linear weights.
    b:        (3,) or (3, 1) stacked biases.
    saliency: (B, T)     raw saliency; mask = (saliency >= 0) computed in-kernel
                         (matches torch.where(saliency >= 0, 1, 0)).
    Returns (center, window, offset), each (B, T) float32 (NMS applied).
    """
    assert kernel_size % 2 == 1, (
        "F.max_pool1d with even kernel is asymmetric; only odd kernel_size "
        "is supported (module default is 1).")
    B, T, C = x.shape
    M = B * T
    x2 = x.reshape(M, C)                                    # lane-preserving
    w = w.astype(x.dtype)                                   # bf16 MXU operand
    bias = jnp.asarray(b).reshape(3, 1).astype(jnp.float32)
    sal = saliency.reshape(1, M).astype(jnp.float32)

    m_tile = _pick_m_tile(M, T, C, x.dtype.itemsize, kernel_size)
    num_chunks = M // m_tile

    kern = functools.partial(_boundary_head_kernel,
                             kernel_size=kernel_size, t_len=T)

    out = pl.pallas_call(
        kern,
        out_shape=jax.ShapeDtypeStruct((3, M), jnp.float32),
        grid_spec=pl.GridSpec(
            grid=(num_chunks,),
            in_specs=[
                pl.BlockSpec((m_tile, C), lambda i: (i, 0)),
                pl.BlockSpec((3, C), lambda i: (0, 0)),
                pl.BlockSpec((3, 1), lambda i: (0, 0)),
                pl.BlockSpec((1, m_tile), lambda i: (0, i)),
            ],
            out_specs=pl.BlockSpec((3, m_tile), lambda i: (0, i)),
        ),
        compiler_params=pltpu.CompilerParams(
            # Chunks are independent -> shard across TensorCores on v7x.
            # Block sizes are chosen well under the default scoped VMEM, so no
            # explicit vmem_limit_bytes is needed on any generation.
            dimension_semantics=("parallel",),
        ),
    )(x2, w, bias, sal)

    preds = out.reshape(3, B, T)                            # views of the slab
    return preds[0], preds[1], preds[2]


def get_boundary(center_pred, window_pred, offset_pred, *, unit=2,
                 max_num_moments=100):
    """Plain-JAX glue matching BoundaryHead.get_boundary (the max-pool NMS is
    already applied inside the kernel).  Works on (B, T) inputs."""
    T = center_pred.shape[-1]
    topk = min(max_num_moments, T)
    scores, inds = jax.lax.top_k(center_pred, topk)                 # (B, topk)
    offset_g = jnp.maximum(jnp.take_along_axis(offset_pred, inds, axis=-1), 0.0)
    window_g = jnp.maximum(jnp.take_along_axis(window_pred, inds, axis=-1), 0.0)
    center = inds.astype(jnp.float32) + offset_g
    left = center - window_g / 2.0
    right = center + window_g / 2.0
    boundary = jnp.stack([left, right], axis=-1)
    boundary = jnp.clip(boundary, 0.0, float(T - 1)) * unit
    boundary = boundary.at[..., 1].add(float(unit))
    return jnp.concatenate([boundary, scores[..., None]], axis=-1)  # (B,topk,3)


def boundary_head_forward(inputs, saliency, *, w, b, kernel_size=1, unit=2,
                          max_num_moments=100, pred_indices=(-1,)):
    """Mode='test' forward pass of BoundaryHead."""
    # TODO(synk): get_targets + training losses (GaussianFocal/L1) are skipped;
    # they use data-dependent per-moment Python loops and only run when
    # mode != 'test'.
    pred_idx = sorted({idx % len(inputs) for idx in pred_indices})
    out = []
    # One pallas_call per level: avoids the HBM stack-copy of all levels'
    # activations (a per-level launch is far cheaper than re-copying them).
    for i in pred_idx:
        center, window, offset = boundary_head_preds_level(
            inputs[i], w, b, saliency, kernel_size=kernel_size)
        out.append(get_boundary(center, window, offset, unit=unit,
                                max_num_moments=max_num_moments))   # (B,topk,3)
    # torch.cat(out, dim=1): per-level boundaries concatenated along moments.
    return jnp.concatenate(out, axis=1)


if __name__ == "__main__":
    key = jax.random.PRNGKey(0)
    B, T, C = 2, 8, 32  # batch, num_clips, hidden dims=[32, 1]

    k_x, k_w, k_b, k_s = jax.random.split(key, 4)
    # Keep activations in bf16 so the kernel's HBM traffic + MXU operands are
    # bf16 (f32 accumulation inside the kernel).
    x = jax.random.normal(k_x, (B, T, C), dtype=jnp.float32).astype(jnp.bfloat16)
    saliency = jax.random.normal(k_s, (B, T), dtype=jnp.float32)

    # Three Linear(C, 1) heads stacked as rows: (3, C) weight, (3, 1) bias.
    w = jax.random.normal(k_w, (3, C), dtype=jnp.float32) * 0.1
    b = jax.random.normal(k_b, (3, 1), dtype=jnp.float32) * 0.1

    boundary = boundary_head_forward(
        [x], saliency, w=w, b=b,
        kernel_size=1, unit=2, max_num_moments=100, pred_indices=(-1,))
    jax.block_until_ready(boundary)
    assert boundary.shape == (B, min(100, T), 3)
    print("KERNEL_OK")
</pallas_src>

<mosaic_0001>
module attributes {stable_mosaic.version = 11 : i64} {
  func.func @_boundary_head_kernel(%arg0: i32, %arg1: memref<16x32xbf16, #tpu.memory_space<vmem>>, %arg2: memref<3x32xbf16, #tpu.memory_space<vmem>>, %arg3: memref<3x1xf32, #tpu.memory_space<vmem>>, %arg4: memref<1x16xf32, #tpu.memory_space<vmem>>, %arg5: memref<3x16xf32, #tpu.memory_space<vmem>>) attributes {dimension_semantics = [#tpu.dimension_semantics<parallel>], iteration_bounds = array<i64: 1>, scalar_prefetch = 0 : i64, scratch_operands = 0 : i64, tpu.core_type = #tpu.core_type<tc>, window_params = [{transform_indices = @transform_0, window_bounds = array<i64: 16, 32>}, {pipeline_mode = #tpu.pipeline_mode<synchronous>, transform_indices = @transform_1, window_bounds = array<i64: 3, 32>}, {pipeline_mode = #tpu.pipeline_mode<synchronous>, transform_indices = @transform_2, window_bounds = array<i64: 3, 1>}, {transform_indices = @transform_3, window_bounds = array<i64: 1, 16>}, {transform_indices = @transform_4, window_bounds = array<i64: 3, 16>}]} {
    %c0 = arith.constant 0 : index
    %c0_0 = arith.constant 0 : index
    %0 = vector.load %arg1[%c0, %c0_0] : memref<16x32xbf16, #tpu.memory_space<vmem>>, vector<16x32xbf16>
    %c0_1 = arith.constant 0 : index
    %c0_2 = arith.constant 0 : index
    %1 = vector.load %arg2[%c0_1, %c0_2] : memref<3x32xbf16, #tpu.memory_space<vmem>>, vector<3x32xbf16>
    %c0_3 = arith.constant 0 : index
    %c0_4 = arith.constant 0 : index
    %2 = vector.load %arg3[%c0_3, %c0_4] : memref<3x1xf32, #tpu.memory_space<vmem>>, vector<3x1xf32>
    %c0_5 = arith.constant 0 : index
    %c0_6 = arith.constant 0 : index
    %3 = vector.load %arg4[%c0_5, %c0_6] : memref<1x16xf32, #tpu.memory_space<vmem>>, vector<1x16xf32>
    %cst = arith.constant 0.000000e+00 : f32
    %4 = vector.broadcast %cst : f32 to vector<1x16xf32>
    %5 = arith.cmpf oge, %3, %4 : vector<1x16xf32>
    %6 = arith.extui %5 : vector<1x16xi1> to vector<1x16xi32>
    %7 = arith.sitofp %6 : vector<1x16xi32> to vector<1x16xf32>
    "tpu.trace_start"() <{level = 10 : i32, message = "kc,mc->km"}> : () -> ()
    %cst_7 = arith.constant dense<0.000000e+00> : vector<3x16xf32>
    %8 = tpu.matmul %1, %0, %cst_7 {dimension_numbers = #tpu.dot_dimension_numbers<[1], [1], [0], [0], [0, 0, 1, 0], [], []>} : vector<3x32xbf16>, vector<16x32xbf16>, vector<3x16xf32> -> vector<3x16xf32>
    "tpu.trace_stop"() : () -> ()
    %9 = vector.broadcast %2 : vector<3x1xf32> to vector<3x16xf32>
    %10 = arith.addf %8, %9 : vector<3x16xf32>
    %11 = arith.negf %10 : vector<3x16xf32>
    %12 = math.exp %11 : vector<3x16xf32>
    %cst_8 = arith.constant 1.000000e+00 : f32
    %13 = vector.broadcast %cst_8 : f32 to vector<3x16xf32>
    %14 = arith.addf %13, %12 : vector<3x16xf32>
    %15 = arith.divf %13, %14 : vector<3x16xf32>
    %16 = vector.broadcast %7 : vector<1x16xf32> to vector<3x16xf32>
    %17 = arith.mulf %15, %16 : vector<3x16xf32>
    %18 = arith.cmpf oeq, %17, %17 : vector<3x16xf32>
    %19 = arith.extui %18 : vector<3x16xi1> to vector<3x16xi32>
    %20 = arith.sitofp %19 : vector<3x16xi32> to vector<3x16xf32>
    %21 = arith.mulf %17, %20 : vector<3x16xf32>
    %22 = tpu.iota {dimensions = array<i32: 0>} : vector<3x16xi32>
    %c0_i32 = arith.constant 0 : i32
    %23 = vector.broadcast %c0_i32 : i32 to vector<3x16xi32>
    %24 = arith.cmpi eq, %22, %23 : vector<3x16xi32>
    %25 = arith.select %24, %21, %10 : vector<3x16xi1>, vector<3x16xf32>
    %c0_9 = arith.constant 0 : index
    %c0_10 = arith.constant 0 : index
    %26 = vector.load %arg5[%c0_9, %c0_10] : memref<3x16xf32, #tpu.memory_space<vmem>>, vector<3x16xf32>
    tpu.vector_store %arg5[%c0_9, %c0_10], %25 {strides = array<i32>} : memref<3x16xf32, #tpu.memory_space<vmem>>, vector<3x16xf32>,
    return
  }
  func.func @transform_0(%arg0: i32) -> (i32, i32) {
    %c0_i32 = arith.constant 0 : i32
    %c0_i32_0 = arith.constant 0 : i32
    return %arg0, %c0_i32 : i32, i32
  }
  func.func @transform_1(%arg0: i32) -> (i32, i32) {
    %c0_i32 = arith.constant 0 : i32
    %c0_i32_0 = arith.constant 0 : i32
    %c0_i32_1 = arith.constant 0 : i32
    return %c0_i32, %c0_i32_0 : i32, i32
  }
  func.func @transform_2(%arg0: i32) -> (i32, i32) {
    %c0_i32 = arith.constant 0 : i32
    %c0_i32_0 = arith.constant 0 : i32
    %c0_i32_1 = arith.constant 0 : i32
    return %c0_i32, %c0_i32_0 : i32, i32
  }
  func.func @transform_3(%arg0: i32) -> (i32, i32) {
    %c0_i32 = arith.constant 0 : i32
    %c0_i32_0 = arith.constant 0 : i32
    return %c0_i32, %arg0 : i32, i32
  }
  func.func @transform_4(%arg0: i32) -> (i32, i32) {
    %c0_i32 = arith.constant 0 : i32
    %c0_i32_0 = arith.constant 0 : i32
    return %c0_i32, %arg0 : i32, i32
  }
}

</mosaic_0001>

<llo_original>
// kernel: tpu_custom_call.1
$region0: #{tpu_custom_call.1}
  #allocation0 [shape = 'u32[]', space=smem, size = 0x4, offset = 0x4, fixed_abs, tag = 'smem constant byte address 0x4 - core index']
  #allocation1 [shape = 'u32[144,128]{1,0:T(1,128)}', space=vmem, size = 0x12000, scoped, tag = 'internal scratch']
  %s0 = inlined_call_operand.hbm [shape: bf16[16,32], index: 0, kind: input, shape index: {}]
  %s1 = inlined_call_operand.vmem [shape: bf16[3,32], index: 1, kind: input, shape index: {}]
  %s2 = inlined_call_operand.vmem [shape: f32[3,1], index: 2, kind: input, shape index: {}]
  %s3 = inlined_call_operand.vmem [shape: f32[1,16], index: 3, kind: input, shape index: {}]
  %s4 = inlined_call_operand.hbm [shape: f32[3,16], index: 4, kind: output, shape index: {}]
  %s5 = sld [smem:[#allocation0]]
  $region30: #{tpu_custom_call.1} parent=0
    _
  %s7 = ssub.s32 1, %s5
  %s8 = scalar_select 0, %s7, %s5
  $region1: #{tpu_custom_call.1} parent=0
    #allocation2 [shape = 'u8[4096]{0}', space=vmem, size = 0x1000, scoped, tag = 'input window, operand 0, single buffered']
    #allocation3 [shape = 's32[1]{0}', space=sflag, size = 0x4, scoped, tag = 'scoped memory for tpu_custom_call.1']
    #allocation4 [shape = 's32[1]{0}', space=sflag, size = 0x4, scoped, tag = 'scoped memory for tpu_custom_call.1']
    #allocation5 [shape = 'u8[2048]{0}', space=vmem, size = 0x800, scoped, tag = 'output window, operand 0, single buffered']
    %9 = vsyncpa [#allocation3], 0
    %10 = vsyncpa [#allocation4], 0
    // Predicated region
    $region2: #{tpu_custom_call.1} parent=1 // pred_check
      _
    $region3: #{tpu_custom_call.1} parent=1 // pred_check_branch
      %12 = sbr.rel (0) target = $region5
    $region4: #{tpu_custom_call.1} parent=1 // pred_region
      %s14 = ssub.s32 128, 128
      %15 = vsyncadd [#allocation3], %s14
      %s16 = sshll.u32 [#allocation2], 4
      %s17 = int_to_ptr.vmem [resolvable:$true] %s16
      %22 = dma.hbm_to_vmem [thread:$0]  %s0, 128, %s17, [#allocation3], 64, 64, 4
    $region5: #{tpu_custom_call.1} parent=1 // pred_fallthru
      _
    // Predicated region
    $region6: #{tpu_custom_call.1} parent=1 // pred_check
      _
    $region7: #{tpu_custom_call.1} parent=1 // pred_check_branch
      %24 = sbr.rel (0) target = $region9
    $region8: #{tpu_custom_call.1} parent=1 // pred_region
      _
    $region9: #{tpu_custom_call.1} parent=1 // pred_fallthru
      _
    // Predicated region
    $region10: #{tpu_custom_call.1} parent=1 // pred_check
      _
    $region11: #{tpu_custom_call.1} parent=1 // pred_check_branch
      %26 = sbr.rel (0) target = $region13
    $region12: #{tpu_custom_call.1} parent=1 // pred_region
      _
    $region13: #{tpu_custom_call.1} parent=1 // pred_fallthru
      _
    // Predicated region
    $region14: #{tpu_custom_call.1} parent=1 // pred_check
      _
    $region15: #{tpu_custom_call.1} parent=1 // pred_check_branch
      %28 = sbr.rel (0) target = $region17
    $region16: #{tpu_custom_call.1} parent=1 // pred_region
      _
    $region17: #{tpu_custom_call.1} parent=1 // pred_fallthru
      _
    // Predicated region
    $region18: #{tpu_custom_call.1} parent=1 // pred_check
      _
    $region19: #{tpu_custom_call.1} parent=1 // pred_check_branch
      %30 = sbr.rel (0) target = $region21
    $region20: #{tpu_custom_call.1} parent=1 // pred_region
      %31 = dma.done [#allocation3], 128
    $region21: #{tpu_custom_call.1} parent=1 // pred_fallthru
      _
    %v33 = vld [vmem:[#allocation2] sm:$0xf]
    %v34 = vld [vmem:[#allocation2 + $0x4] sm:$0xf]
    %v35 = vld [vmem:[%s1] sm:$0x3]
    %v36 = vld [vmem:[%s2] sm:$0x7]
    %v37 = vld [vmem:[%s3] sm:$0x1]
    %vm38 = vcmp.ge.f32.partialorder %v37, 0.0
    %v39 = vsel %vm38, 1, 0
    %v40 = vcvt.s32.f32 %v39
    %42 = vset.pattern.permute.xlu0 0
    %43 = vperm.xlu0 %42, %v36
    %v44 = vpop.permute.xlu0 %43
    %v48 = vunpack.c.l.b16 %v33
    %v49 = vunpack.c.l.b16 %v34
    %v50 = vpack.c.b16 %v49, %v48
    %vm51 = vcmask 261120
    %v53 = vsel %vm51, %v35, 0
    %v56 = vsel %vm51, %v50, 0
    %58 = vmatprep.subr.bf16.mxu0 0
    %59 = vmatpush1.bf16.xpose.msra.mxu0 %v56
    %60 = vmatprep.subr.bf16.mxu0 0
    %61 = vmatpush1.bf16.xpose.msra.mxu0 0
    %62 = vmatprep.subr.bf16.mxu0 0
    %63 = vmatpush1.bf16.xpose.msra.mxu0 0
    %64 = vmatprep.subr.bf16.mxu0 0
    %65 = vmatpush1.bf16.xpose.msra.mxu0 0
    %66 = vmatprep.subr.bf16.mxu0 0
    %67 = vmatpush1.bf16.xpose.msra.mxu0 0
    %68 = vmatprep.subr.bf16.mxu0 0
    %69 = vmatpush1.bf16.xpose.msra.mxu0 0
    %70 = vmatprep.subr.bf16.mxu0 0
    %71 = vmatpush1.bf16.xpose.msra.mxu0 0
    %72 = vmatprep.subr.bf16.mxu0 0
    %73 = vmatpush1.bf16.xpose.msra.mxu0 0
    %74 = vmatprep.subr.bf16.mxu0 0
    %75 = vmatpush1.bf16.xpose.msra.mxu0 0
    %76 = vmatprep.subr.bf16.mxu0 0
    %77 = vmatpush1.bf16.xpose.msra.mxu0 0
    %78 = vmatprep.subr.bf16.mxu0 0
    %79 = vmatpush1.bf16.xpose.msra.mxu0 0
    %80 = vmatprep.subr.bf16.mxu0 0
    %81 = vmatpush1.bf16.xpose.msra.mxu0 0
    %82 = vmatprep.subr.bf16.mxu0 0
    %83 = vmatpush1.bf16.xpose.msra.mxu0 0
    %84 = vmatprep.subr.bf16.mxu0 0
    %85 = vmatpush1.bf16.xpose.msra.mxu0 0
    %86 = vmatprep.subr.bf16.mxu0 0
    %87 = vmatpush1.bf16.xpose.msra.mxu0 0
    %88 = vmatprep.subr.bf16.mxu0 0
    %89 = vmatpush1.bf16.xpose.msra.mxu0 0
    %90 = vmatprep.mubr.bf16.mxu0 0
    %91 = vmatmul.mubr.bf16.gmra.mrb[0].mxu0 %v53
    %v92 = vpop.f32.mrb[0].mxu0
    %v93 = vadd.f32 %v44, %v92
    %v94 = vpop.f32.mrb[0].mxu0
    %v95 = vpop.f32.mrb[0].mxu0
    %v96 = vpop.f32.mrb[0].mxu0
    %97 = vdwg.mxu0
    %v98 = vxor.u32 %v93, 2147483648
    %v99 = vmul.f32 %v98, 1.442695
    %v100 = vpow.pop %v99
    %v101 = vadd.f32 %v100, 1.0
    %v102 = vrcp.pop %v101
    %v103 = vmul.f32 1.0, %v102
    %v105 = vlaneseq
    %v106 = vshrl.u32 %v105, 7
    %v107 = vsub.s32 0, %v106
    %v108 = vrot.slane %v40, %v107
    %v110 = vmul.f32 %v103, %v108
    %vm111 = vcmp.eq.f32.partialorder %v110, %v110
    %v112 = vsel %vm111, 1, 0
    %v113 = vcvt.s32.f32 %v112
    %v114 = vmul.f32 %v110, %v113
    %v115 = vlaneseq
    %v116 = vshrl.u32 %v115, 7
    %vm117 = vcmp.eq.s32.totalorder %v116, 0
    %v118 = vsel %vm117, %v114, %v93
    %vm119 = vcmask 124928
    %120 = vst.msk [vmem:[#allocation5] sm:$0x7] %vm119, %v118
    // Predicated region
    $region22: #{tpu_custom_call.1} parent=1 // pred_check
      _
    $region23: #{tpu_custom_call.1} parent=1 // pred_check_branch
      %122 = sbr.rel (0) target = $region25
    $region24: #{tpu_custom_call.1} parent=1 // pred_region
      %s124 = ssub.s32 64, 64
      %125 = vsyncadd [#allocation4], %s124
      %s127 = sshll.u32 [#allocation5], 4
      %s128 = int_to_ptr.vmem [resolvable:$true] %s127
      %130 = dma.vmem_to_hbm [thread:$0]  %s128, 64, %s4, [#allocation4]
    $region25: #{tpu_custom_call.1} parent=1 // pred_fallthru
      _
    // Predicated region
    $region26: #{tpu_custom_call.1} parent=1 // pred_check
      _
    $region27: #{tpu_custom_call.1} parent=1 // pred_check_branch
      %132 = sbr.rel (0) target = $region29
    $region28: #{tpu_custom_call.1} parent=1 // pred_region
      %133 = dma.done [#allocation4], 64
    $region29: #{tpu_custom_call.1} parent=1 // pred_fallthru
      _
    %134 = vsyncpa [#allocation3], 1
    %135 = vsyncpa [#allocation4], 1

</llo_original>
